<compile_context>
chip_gen: v5e
topology: v5e:2x2
jax: 0.10.0
libtpu: 0.0.40
codegen_flags: <defaults>
</compile_context>

<pallas_src>
import jax
import jax.numpy as jnp
from jax.experimental import pallas as pl
from jax.experimental.pallas import tpu as pltpu

# ---- model dimensions (small, consistent with the module's forward) ----
D = 32      # encoder hidden / pooled dim
S = 8       # sequence length
E = 4       # ensemble_size
V = 64      # vocab size per encoder
BQ = 2      # question batch
BC = 4      # context batch


# ---------------------------------------------------------------------------
# Fused kernel: embedding lookup (one-hot @ table), masked mean-pool for BOTH
# encoders (one block-diag matmul), per-encoder pooler, batch-ensemble matmul.
# ---------------------------------------------------------------------------
def _make_biencoder_kernel(b_q, b_c, seq, dim, vocab, n_e):
    b_all = b_q + b_c
    bs = b_all * seq
    tok_rows = 2 * vocab            # stacked q/ctx token tables
    seg_rows = 8                    # stacked q/ctx segment tables, padded to 8
    qw_off = tok_rows + seg_rows    # question pooler weight rows (8-aligned)
    cw_off = qw_off + dim           # context pooler weight rows (8-aligned)
    qb_off = cw_off + dim           # question pooler bias row
    cb_off = qb_off + 1             # context pooler bias row

    def kernel(idx_ref, pool_ref, tab_ref, wfull_ref, q_out_ref, c_out_ref):
        # --- fused embedding lookup: one-hot(ids) @ stacked tables (MXU) ---
        idx = idx_ref[...]                                     # (bs, 2) int32
        tok_ids = idx[:, 0:1]                                  # (bs, 1)
        seg_ids = idx[:, 1:2]                                  # (bs, 1)
        tok_oh = (tok_ids == jax.lax.broadcasted_iota(
            jnp.int32, (bs, tok_rows), 1)).astype(jnp.float32)  # (bs, 2V)
        seg_oh = (seg_ids == jax.lax.broadcasted_iota(
            jnp.int32, (bs, seg_rows), 1)).astype(jnp.float32)  # (bs, 8)
        emb = jnp.dot(tok_oh, tab_ref[0:tok_rows, :],
                      preferred_element_type=jnp.float32)
        emb = emb + jnp.dot(seg_oh, tab_ref[tok_rows:tok_rows + seg_rows, :],
                            preferred_element_type=jnp.float32)  # (bs, D)

        # --- masked mean pooling for BOTH encoders: one block-diag matmul ---
        # pool_ref[b, b*S+s] = mask[b,s] / seq_len[b]  (zeros elsewhere)
        mean_all = jnp.dot(pool_ref[...], emb,
                           preferred_element_type=jnp.float32)   # (b_all, D)

        # --- per-encoder dense pooler + tanh (static ref slices, no DMAs) ---
        q_pooled = jnp.tanh(
            jnp.dot(mean_all[0:b_q, :], tab_ref[qw_off:qw_off + dim, :],
                    preferred_element_type=jnp.float32)
            + tab_ref[qb_off:qb_off + 1, :])                     # (b_q, D)
        c_pooled = jnp.tanh(
            jnp.dot(mean_all[b_q:b_all, :], tab_ref[cw_off:cw_off + dim, :],
                    preferred_element_type=jnp.float32)
            + tab_ref[cb_off:cb_off + 1, :])                     # (b_c, D)
        c_out_ref[...] = c_pooled

        # --- batch ensemble: single (b_q, D) @ (D, E*D) matmul; the (2, 128)
        #     result feeds the lane-dense store directly ---
        q_out_ref[...] = jnp.dot(q_pooled, wfull_ref[...],
                                 preferred_element_type=jnp.float32)

    return kernel


# ---------------------------------------------------------------------------
# BiEncoder forward (batch_ensemble=True)
# ---------------------------------------------------------------------------
def biencoder_forward(params, question_ids, question_segments, question_attn_mask,
                      context_ids, ctx_segments, ctx_attn_mask):
    qp, cp = params["q_enc"], params["ctx_enc"]
    b_q, seq = question_ids.shape
    b_c = context_ids.shape[0]
    n_e, dim = params["alpha"].shape
    vocab = qp["tok_emb"].shape[0]
    b_all = b_q + b_c
    bs = b_all * seq

    # glue: pack token/segment indices; ctx indices offset into stacked tables
    tok_all = jnp.concatenate([question_ids, context_ids + vocab], axis=0)
    seg_all = jnp.concatenate([question_segments, ctx_segments + 2], axis=0)
    idx_all = jnp.stack([tok_all.reshape(-1), seg_all.reshape(-1)],
                        axis=1).astype(jnp.int32)                     # (bs, 2)

    # glue: normalized masks -> block-diagonal pooling matrix (b_all, bs)
    # NOTE: all-zero mask rows are a precondition violation (same as torch ref).
    mask_all = jnp.concatenate([question_attn_mask, ctx_attn_mask],
                               axis=0).astype(jnp.float32)            # (b_all, S)
    mask_scaled = mask_all / jnp.sum(mask_all, axis=1, keepdims=True)
    same_row = (jnp.arange(bs)[None, :] // seq) == jnp.arange(b_all)[:, None]
    pool_mat = jnp.where(
        same_row, jnp.broadcast_to(mask_scaled.reshape(1, bs), (b_all, bs)),
        0.0).astype(jnp.float32)                                      # (b_all, bs)

    # glue: pack ALL small parameters into one (202, D) slab -> single DMA
    # TODO(synk): in a real model this slab / W_full would be packed once at
    # init instead of per forward call (pure one-time parameter plumbing).
    tables = jnp.concatenate([
        qp["tok_emb"], cp["tok_emb"],                 # rows [0, 2V)
        qp["seg_emb"], cp["seg_emb"],                 # rows [2V, 2V+4)
        jnp.zeros((4, dim), jnp.float32),             # pad seg section to 8 rows
        qp["pool_w"], cp["pool_w"],                   # 2*dim rows (8-aligned)
        qp["pool_b"], cp["pool_b"],                   # 2 bias rows
    ], axis=0).astype(jnp.float32)                    # (2V+8+2D+2, D)

    # glue: full rank-1 ensemble weight as a single (D, E*D) lane-dense matrix
    # W_full[q, e*D+d] = alpha[e,q] * gamma[e,d] * slow[d,d] + I[q,d]
    diag_slow = jnp.diagonal(params["slow_weight"])                   # (D,)
    w_ens = params["alpha"][:, :, None] * \
        (params["gamma"] * diag_slow[None, :])[:, None, :]            # (E,D,D)[e,q,d]
    w_ens = w_ens + jnp.eye(dim, dtype=jnp.float32)[None, :, :]
    w_full = jnp.transpose(w_ens, (1, 0, 2)).reshape(dim, n_e * dim)  # (D, E*D)

    kernel = _make_biencoder_kernel(b_q, b_c, seq, dim, vocab, n_e)
    vmem = lambda: pl.BlockSpec(memory_space=pltpu.MemorySpace.VMEM)

    q_flat, ctx_pooled = pl.pallas_call(
        kernel,
        out_shape=(
            jax.ShapeDtypeStruct((b_q, n_e * dim), jnp.float32),  # lane-dense (2,128)
            jax.ShapeDtypeStruct((b_c, dim), jnp.float32),
        ),
        in_specs=[vmem(), vmem(), vmem(), vmem()],
        out_specs=(vmem(), vmem()),
    )(idx_all, pool_mat, tables, w_full)

    return q_flat.reshape(b_q, n_e, dim), ctx_pooled


# ---------------------------------------------------------------------------
# Pure-JAX reference (mirrors the torch einsum semantics exactly)
# ---------------------------------------------------------------------------
def reference_forward(params, qi, qs, qm, ci, cs, cm):
    def enc(p, ids, segs, mask):
        emb = p["tok_emb"][ids] + p["seg_emb"][segs]
        m = mask.astype(jnp.float32)
        mean = (emb * m[:, :, None]).sum(1) / m.sum(1, keepdims=True)
        return jnp.tanh(mean @ p["pool_w"] + p["pool_b"])

    qp = enc(params["q_enc"], qi, qs, qm)
    cp = enc(params["ctx_enc"], ci, cs, cm)
    fast_weight = jnp.einsum("eq,ed->eqd", params["alpha"], params["gamma"])
    weight = jnp.einsum("eqd,dd->eqd", fast_weight, params["slow_weight"])
    weight = weight + jnp.eye(D, dtype=jnp.float32)[None]
    qp_out = jnp.einsum("bq,eqd->bed", qp, weight)
    return qp_out, cp


# ---------------------------------------------------------------------------
# Deterministic parameter init (kaiming_uniform-style bounds)
# ---------------------------------------------------------------------------
def init_params(key):
    ks = jax.random.split(key, 10)

    def uni(k, shape, fan_in):
        bound = (1.0 / fan_in) ** 0.5
        return jax.random.uniform(k, shape, jnp.float32, -bound, bound)

    def enc_params(k):
        k1, k2, k3, k4 = jax.random.split(k, 4)
        return {
            "tok_emb": jax.random.normal(k1, (V, D), jnp.float32) * 0.02,
            "seg_emb": jax.random.normal(k2, (2, D), jnp.float32) * 0.02,
            "pool_w": uni(k3, (D, D), D),
            "pool_b": uni(k4, (1, D), D),
        }

    return {
        "q_enc": enc_params(ks[0]),
        "ctx_enc": enc_params(ks[1]),
        "alpha": uni(ks[2], (E, D), D),
        "gamma": uni(ks[3], (E, D), D),
        "slow_weight": uni(ks[4], (D, D), D),
    }


if __name__ == "__main__":
    key = jax.random.PRNGKey(0)
    kp, k1, k2 = jax.random.split(key, 3)
    params = init_params(kp)

    question_ids = jax.random.randint(k1, (BQ, S), 0, V, dtype=jnp.int32)
    context_ids = jax.random.randint(k2, (BC, S), 0, V, dtype=jnp.int32)
    question_segments = jnp.zeros((BQ, S), jnp.int32)
    ctx_segments = jnp.zeros((BC, S), jnp.int32)
    # NOTE: attention masks must have at least one active token per row
    # (same divide-by-zero precondition as the reference / torch model).
    q_lens = jnp.array([8, 5], jnp.int32)
    c_lens = jnp.array([8, 6, 4, 7], jnp.int32)
    question_attn_mask = (jnp.arange(S)[None, :] < q_lens[:, None]).astype(jnp.int32)
    ctx_attn_mask = (jnp.arange(S)[None, :] < c_lens[:, None]).astype(jnp.int32)

    fwd = jax.jit(biencoder_forward)
    q_out, ctx_out = fwd(
        params, question_ids, question_segments, question_attn_mask,
        context_ids, ctx_segments, ctx_attn_mask)
    jax.block_until_ready((q_out, ctx_out))

    q_ref, ctx_ref = reference_forward(
        params, question_ids, question_segments, question_attn_mask,
        context_ids, ctx_segments, ctx_attn_mask)

    assert q_out.shape == (BQ, E, D) and ctx_out.shape == (BC, D)
    assert jnp.allclose(q_out, q_ref, atol=1e-5, rtol=1e-5)
    assert jnp.allclose(ctx_out, ctx_ref, atol=1e-5, rtol=1e-5)
    print("KERNEL_OK")
</pallas_src>

<mosaic_0001>
module attributes {stable_mosaic.version = 11 : i64} {
  func.func @kernel(%arg0: memref<48x2xi32, #tpu.memory_space<vmem>>, %arg1: memref<6x48xf32, #tpu.memory_space<vmem>>, %arg2: memref<202x32xf32, #tpu.memory_space<vmem>>, %arg3: memref<32x128xf32, #tpu.memory_space<vmem>>, %arg4: memref<2x128xf32, #tpu.memory_space<vmem>>, %arg5: memref<4x32xf32, #tpu.memory_space<vmem>>) attributes {dimension_semantics = [], scalar_prefetch = 0 : i64, scratch_operands = 0 : i64, tpu.core_type = #tpu.core_type<tc>} {
    %c0 = arith.constant 0 : index
    %c0_0 = arith.constant 0 : index
    %0 = vector.load %arg0[%c0, %c0_0] : memref<48x2xi32, #tpu.memory_space<vmem>>, vector<48x2xi32>
    %1 = vector.extract_strided_slice %0 {offsets = [0, 0], sizes = [48, 1], strides = [1, 1]} : vector<48x2xi32> to vector<48x1xi32>
    %2 = vector.extract_strided_slice %0 {offsets = [0, 1], sizes = [48, 1], strides = [1, 1]} : vector<48x2xi32> to vector<48x1xi32>
    %3 = tpu.iota {dimensions = array<i32: 1>} : vector<48x128xi32>
    %4 = vector.broadcast %1 : vector<48x1xi32> to vector<48x128xi32>
    %5 = arith.cmpi eq, %4, %3 : vector<48x128xi32>
    %6 = arith.extui %5 : vector<48x128xi1> to vector<48x128xi32>
    %7 = arith.sitofp %6 : vector<48x128xi32> to vector<48x128xf32>
    %8 = tpu.iota {dimensions = array<i32: 1>} : vector<48x8xi32>
    %9 = vector.broadcast %2 : vector<48x1xi32> to vector<48x8xi32>
    %10 = arith.cmpi eq, %9, %8 : vector<48x8xi32>
    %11 = arith.extui %10 : vector<48x8xi1> to vector<48x8xi32>
    %12 = arith.sitofp %11 : vector<48x8xi32> to vector<48x8xf32>
    %c0_1 = arith.constant 0 : index
    %c0_2 = arith.constant 0 : index
    %13 = vector.load %arg2[%c0_1, %c0_2] : memref<202x32xf32, #tpu.memory_space<vmem>>, vector<128x32xf32>
    %cst = arith.constant dense<0.000000e+00> : vector<48x32xf32>
    %14 = tpu.matmul %7, %13, %cst {dimension_numbers = #tpu.dot_dimension_numbers<[1], [0], [0], [1], [0, 0, 1, 1], [], []>} : vector<48x128xf32>, vector<128x32xf32>, vector<48x32xf32> -> vector<48x32xf32>
    %c128 = arith.constant 128 : index
    %c0_3 = arith.constant 0 : index
    %15 = vector.load %arg2[%c128, %c0_3] : memref<202x32xf32, #tpu.memory_space<vmem>>, vector<8x32xf32>
    %cst_4 = arith.constant dense<0.000000e+00> : vector<48x32xf32>
    %16 = tpu.matmul %12, %15, %cst_4 {dimension_numbers = #tpu.dot_dimension_numbers<[1], [0], [0], [1], [0, 0, 1, 1], [], []>} : vector<48x8xf32>, vector<8x32xf32>, vector<48x32xf32> -> vector<48x32xf32>
    %17 = arith.addf %14, %16 : vector<48x32xf32>
    %c0_5 = arith.constant 0 : index
    %c0_6 = arith.constant 0 : index
    %18 = vector.load %arg1[%c0_5, %c0_6] : memref<6x48xf32, #tpu.memory_space<vmem>>, vector<6x48xf32>
    %cst_7 = arith.constant dense<0.000000e+00> : vector<6x32xf32>
    %19 = tpu.matmul %18, %17, %cst_7 {dimension_numbers = #tpu.dot_dimension_numbers<[1], [0], [0], [1], [0, 0, 1, 1], [], []>} : vector<6x48xf32>, vector<48x32xf32>, vector<6x32xf32> -> vector<6x32xf32>
    %20 = vector.extract_strided_slice %19 {offsets = [0, 0], sizes = [2, 32], strides = [1, 1]} : vector<6x32xf32> to vector<2x32xf32>
    %c136 = arith.constant 136 : index
    %c0_8 = arith.constant 0 : index
    %21 = vector.load %arg2[%c136, %c0_8] : memref<202x32xf32, #tpu.memory_space<vmem>>, vector<32x32xf32>
    %cst_9 = arith.constant dense<0.000000e+00> : vector<2x32xf32>
    %22 = tpu.matmul %20, %21, %cst_9 {dimension_numbers = #tpu.dot_dimension_numbers<[1], [0], [0], [1], [0, 0, 1, 1], [], []>} : vector<2x32xf32>, vector<32x32xf32>, vector<2x32xf32> -> vector<2x32xf32>
    %c200 = arith.constant 200 : index
    %c0_10 = arith.constant 0 : index
    %23 = vector.load %arg2[%c200, %c0_10] : memref<202x32xf32, #tpu.memory_space<vmem>>, vector<1x32xf32>
    %24 = vector.broadcast %23 : vector<1x32xf32> to vector<2x32xf32>
    %25 = arith.addf %22, %24 : vector<2x32xf32>
    %26 = math.tanh %25 : vector<2x32xf32>
    %27 = vector.extract_strided_slice %19 {offsets = [2, 0], sizes = [4, 32], strides = [1, 1]} : vector<6x32xf32> to vector<4x32xf32>
    %c168 = arith.constant 168 : index
    %c0_11 = arith.constant 0 : index
    %28 = vector.load %arg2[%c168, %c0_11] : memref<202x32xf32, #tpu.memory_space<vmem>>, vector<32x32xf32>
    %cst_12 = arith.constant dense<0.000000e+00> : vector<4x32xf32>
    %29 = tpu.matmul %27, %28, %cst_12 {dimension_numbers = #tpu.dot_dimension_numbers<[1], [0], [0], [1], [0, 0, 1, 1], [], []>} : vector<4x32xf32>, vector<32x32xf32>, vector<4x32xf32> -> vector<4x32xf32>
    %c201 = arith.constant 201 : index
    %c0_13 = arith.constant 0 : index
    %30 = vector.load %arg2[%c201, %c0_13] : memref<202x32xf32, #tpu.memory_space<vmem>>, vector<1x32xf32>
    %31 = vector.broadcast %30 : vector<1x32xf32> to vector<4x32xf32>
    %32 = arith.addf %29, %31 : vector<4x32xf32>
    %33 = math.tanh %32 : vector<4x32xf32>
    %c0_14 = arith.constant 0 : index
    %c0_15 = arith.constant 0 : index
    %34 = vector.load %arg5[%c0_14, %c0_15] : memref<4x32xf32, #tpu.memory_space<vmem>>, vector<4x32xf32>
    tpu.vector_store %arg5[%c0_14, %c0_15], %33 {strides = array<i32>} : memref<4x32xf32, #tpu.memory_space<vmem>>, vector<4x32xf32>,
    %c0_16 = arith.constant 0 : index
    %c0_17 = arith.constant 0 : index
    %35 = vector.load %arg3[%c0_16, %c0_17] : memref<32x128xf32, #tpu.memory_space<vmem>>, vector<32x128xf32>
    %cst_18 = arith.constant dense<0.000000e+00> : vector<2x128xf32>
    %36 = tpu.matmul %26, %35, %cst_18 {dimension_numbers = #tpu.dot_dimension_numbers<[1], [0], [0], [1], [0, 0, 1, 1], [], []>} : vector<2x32xf32>, vector<32x128xf32>, vector<2x128xf32> -> vector<2x128xf32>
    %c0_19 = arith.constant 0 : index
    %c0_20 = arith.constant 0 : index
    %37 = vector.load %arg4[%c0_19, %c0_20] : memref<2x128xf32, #tpu.memory_space<vmem>>, vector<2x128xf32>
    tpu.vector_store %arg4[%c0_19, %c0_20], %36 {strides = array<i32>} : memref<2x128xf32, #tpu.memory_space<vmem>>, vector<2x128xf32>,
    return
  }
}

</mosaic_0001>

<llo_original>
// kernel: biencoder_forward.1
$region0: #{biencoder_forward.1}
  #allocation0 [shape = 'u32[]', space=smem, size = 0x4, offset = 0x4, fixed_abs, tag = 'smem constant byte address 0x4 - core index']
  #allocation1 [shape = 'u32[72,128]{1,0:T(1,128)}', space=vmem, size = 0x9000, scoped, tag = 'internal scratch']
  %s0 = inlined_call_operand.vmem [shape: s32[48,2], index: 0, kind: input, shape index: {}]
  %s1 = inlined_call_operand.vmem [shape: f32[6,48], index: 1, kind: input, shape index: {}]
  %s2 = inlined_call_operand.vmem [shape: f32[202,32], index: 2, kind: input, shape index: {}]
  %s3 = inlined_call_operand.vmem [shape: f32[32,128], index: 3, kind: input, shape index: {}]
  %s4 = inlined_call_operand.vmem [shape: f32[2,128], index: 4, kind: output, shape index: {0}]
  %s5 = inlined_call_operand.hbm [shape: f32[4,32], index: 5, kind: output, shape index: {1}]
  %6 = xla_tuple %s4, %s5
  %s7 = sld [smem:[#allocation0]]
  $region34: #{biencoder_forward.1} parent=0
    _
  %s9 = ssub.s32 1, %s7
  %s10 = scalar_select 0, %s9, %s7
  $region1: #{biencoder_forward.1} parent=0
    #allocation2 [shape = 'u8[2048]{0}', space=vmem, size = 0x800, scoped, tag = 'output window, operand 1, single buffered']
    #allocation3 [shape = 's32[1]{0}', space=sflag, size = 0x4, scoped, tag = 'scoped memory for biencoder_forward.1']
    %11 = vsyncpa [#allocation3], 0
    // Predicated region
    $region2: #{biencoder_forward.1} parent=1 // pred_check
      _
    $region3: #{biencoder_forward.1} parent=1 // pred_check_branch
      %13 = sbr.rel (0) target = $region5
    $region4: #{biencoder_forward.1} parent=1 // pred_region
      _
    $region5: #{biencoder_forward.1} parent=1 // pred_fallthru
      _
    // Predicated region
    $region6: #{biencoder_forward.1} parent=1 // pred_check
      _
    $region7: #{biencoder_forward.1} parent=1 // pred_check_branch
      %15 = sbr.rel (0) target = $region9
    $region8: #{biencoder_forward.1} parent=1 // pred_region
      _
    $region9: #{biencoder_forward.1} parent=1 // pred_fallthru
      _
    // Predicated region
    $region10: #{biencoder_forward.1} parent=1 // pred_check
      _
    $region11: #{biencoder_forward.1} parent=1 // pred_check_branch
      %17 = sbr.rel (0) target = $region13
    $region12: #{biencoder_forward.1} parent=1 // pred_region
      _
    $region13: #{biencoder_forward.1} parent=1 // pred_fallthru
      _
    // Predicated region
    $region14: #{biencoder_forward.1} parent=1 // pred_check
      _
    $region15: #{biencoder_forward.1} parent=1 // pred_check_branch
      %19 = sbr.rel (0) target = $region17
    $region16: #{biencoder_forward.1} parent=1 // pred_region
      _
    $region17: #{biencoder_forward.1} parent=1 // pred_fallthru
      _
    %v20 = vld [vmem:[%s0] sm:$0xff]
    %v21 = vld [vmem:[%s0 + $0x8] sm:$0xff]
    %v22 = vld [vmem:[%s0 + $0x10] sm:$0xff]
    %v23 = vld [vmem:[%s0 + $0x18] sm:$0xff]
    %v24 = vld [vmem:[%s0 + $0x20] sm:$0xff]
    %v25 = vld [vmem:[%s0 + $0x28] sm:$0xff]
    %v26 = vlaneseq
    %v27 = vand.u32 %v26, 127
    %28 = vset.pattern.permute.xlu0 0
    %29 = vperm.xlu0 %28, %v20
    %v30 = vpop.permute.xlu0 %29
    %31 = vset.pattern.permute.xlu0 0
    %32 = vperm.xlu0 %31, %v21
    %v33 = vpop.permute.xlu0 %32
    %34 = vset.pattern.permute.xlu0 0
    %35 = vperm.xlu0 %34, %v22
    %v36 = vpop.permute.xlu0 %35
    %37 = vset.pattern.permute.xlu0 0
    %38 = vperm.xlu0 %37, %v23
    %v39 = vpop.permute.xlu0 %38
    %40 = vset.pattern.permute.xlu0 0
    %41 = vperm.xlu0 %40, %v24
    %v42 = vpop.permute.xlu0 %41
    %43 = vset.pattern.permute.xlu0 0
    %44 = vperm.xlu0 %43, %v25
    %v45 = vpop.permute.xlu0 %44
    %vm46 = vcmp.eq.s32.totalorder %v30, %v27
    %vm47 = vcmp.eq.s32.totalorder %v33, %v27
    %vm48 = vcmp.eq.s32.totalorder %v36, %v27
    %vm49 = vcmp.eq.s32.totalorder %v39, %v27
    %vm50 = vcmp.eq.s32.totalorder %v42, %v27
    %vm51 = vcmp.eq.s32.totalorder %v45, %v27
    %v52 = vsel %vm46, 1, 0
    %v53 = vsel %vm47, 1, 0
    %v54 = vsel %vm48, 1, 0
    %v55 = vsel %vm49, 1, 0
    %v56 = vsel %vm50, 1, 0
    %v57 = vsel %vm51, 1, 0
    %v58 = vcvt.s32.f32 %v52
    %v59 = vcvt.s32.f32 %v53
    %v60 = vcvt.s32.f32 %v54
    %v61 = vcvt.s32.f32 %v55
    %v62 = vcvt.s32.f32 %v56
    %v63 = vcvt.s32.f32 %v57
    %64 = vset.pattern.permute.xlu0 1
    %65 = vperm.xlu0 %64, %v20
    %v66 = vpop.permute.xlu0 %65
    %67 = vset.pattern.permute.xlu0 1
    %68 = vperm.xlu0 %67, %v21
    %v69 = vpop.permute.xlu0 %68
    %70 = vset.pattern.permute.xlu0 1
    %71 = vperm.xlu0 %70, %v22
    %v72 = vpop.permute.xlu0 %71
    %73 = vset.pattern.permute.xlu0 1
    %74 = vperm.xlu0 %73, %v23
    %v75 = vpop.permute.xlu0 %74
    %76 = vset.pattern.permute.xlu0 1
    %77 = vperm.xlu0 %76, %v24
    %v78 = vpop.permute.xlu0 %77
    %79 = vset.pattern.permute.xlu0 1
    %80 = vperm.xlu0 %79, %v25
    %v81 = vpop.permute.xlu0 %80
    %vm82 = vcmp.eq.s32.totalorder %v66, %v27
    %vm83 = vcmp.eq.s32.totalorder %v69, %v27
    %vm84 = vcmp.eq.s32.totalorder %v72, %v27
    %vm85 = vcmp.eq.s32.totalorder %v75, %v27
    %vm86 = vcmp.eq.s32.totalorder %v78, %v27
    %vm87 = vcmp.eq.s32.totalorder %v81, %v27
    %v88 = vsel %vm82, 1, 0
    %v89 = vsel %vm83, 1, 0
    %v90 = vsel %vm84, 1, 0
    %v91 = vsel %vm85, 1, 0
    %v92 = vsel %vm86, 1, 0
    %v93 = vsel %vm87, 1, 0
    %v94 = vcvt.s32.f32 %v88
    %v95 = vcvt.s32.f32 %v89
    %v96 = vcvt.s32.f32 %v90
    %v97 = vcvt.s32.f32 %v91
    %v98 = vcvt.s32.f32 %v92
    %v99 = vcvt.s32.f32 %v93
    %v100 = vld [vmem:[%s2] sm:$0xff]
    %v101 = vld [vmem:[%s2 + $0x8] sm:$0xff]
    %v102 = vld [vmem:[%s2 + $0x10] sm:$0xff]
    %v103 = vld [vmem:[%s2 + $0x18] sm:$0xff]
    %v104 = vld [vmem:[%s2 + $0x20] sm:$0xff]
    %v105 = vld [vmem:[%s2 + $0x28] sm:$0xff]
    %v106 = vld [vmem:[%s2 + $0x30] sm:$0xff]
    %v107 = vld [vmem:[%s2 + $0x38] sm:$0xff]
    %v108 = vld [vmem:[%s2 + $0x40] sm:$0xff]
    %v109 = vld [vmem:[%s2 + $0x48] sm:$0xff]
    %v110 = vld [vmem:[%s2 + $0x50] sm:$0xff]
    %v111 = vld [vmem:[%s2 + $0x58] sm:$0xff]
    %v112 = vld [vmem:[%s2 + $0x60] sm:$0xff]
    %v113 = vld [vmem:[%s2 + $0x68] sm:$0xff]
    %v114 = vld [vmem:[%s2 + $0x70] sm:$0xff]
    %v115 = vld [vmem:[%s2 + $0x78] sm:$0xff]
    %v116 = vld [vmem:[%s2 + $0x80] sm:$0xff]
    %vm117 = vcmask 64512
    %v119 = vsel %vm117, %v94, 0
    %v122 = vsel %vm117, %v95, 0
    %v125 = vsel %vm117, %v96, 0
    %v128 = vsel %vm117, %v97, 0
    %v131 = vsel %vm117, %v98, 0
    %v134 = vsel %vm117, %v99, 0
    %136 = vmatpush.msra.mxu0 0.0
    %137 = vmatpush.msra.mxu0 0.0
    %138 = vmatpush.msra.mxu0 0.0
    %139 = vmatpush.msra.mxu0 0.0
    %140 = vmatpush.msra.mxu0 0.0
    %141 = vmatpush.msra.mxu0 0.0
    %142 = vmatpush.msra.mxu0 0.0
    %143 = vmatpush.msra.mxu0 0.0
    %144 = vmatpush.msra.mxu0 0.0
    %145 = vmatpush.msra.mxu0 0.0
    %146 = vmatpush.msra.mxu0 0.0
    %147 = vmatpush.msra.mxu0 0.0
    %148 = vmatpush.msra.mxu0 0.0
    %149 = vmatpush.msra.mxu0 0.0
    %150 = vmatpush.msra.mxu0 0.0
    %151 = vmatpush.msra.mxu0 %v116
    %152 = vmatmul.f32.gmra.mxu0 %v119
    %v153 = vpop.f32.mrf.mxu0
    %v154 = vadd.f32 0.0, %v153
    %155 = vmatmul.f32.gmra.mxu0 %v122
    %v156 = vpop.f32.mrf.mxu0
    %v157 = vadd.f32 0.0, %v156
    %158 = vmatmul.f32.gmra.mxu0 %v125
    %v159 = vpop.f32.mrf.mxu0
    %v160 = vadd.f32 0.0, %v159
    %161 = vmatmul.f32.gmra.mxu0 %v128
    %v162 = vpop.f32.mrf.mxu0
    %v163 = vadd.f32 0.0, %v162
    %164 = vmatmul.f32.gmra.mxu0 %v131
    %v165 = vpop.f32.mrf.mxu0
    %v166 = vadd.f32 0.0, %v165
    %167 = vmatmul.f32.gmra.mxu0 %v134
    %v168 = vpop.f32.mrf.mxu0
    %v169 = vadd.f32 0.0, %v168
    %170 = vdwg.mxu0
    %171 = vmatpush.msra.mxu0 %v115
    %172 = vmatpush.msra.mxu0 %v114
    %173 = vmatpush.msra.mxu0 %v113
    %174 = vmatpush.msra.mxu0 %v112
    %175 = vmatpush.msra.mxu0 %v111
    %176 = vmatpush.msra.mxu0 %v110
    %177 = vmatpush.msra.mxu0 %v109
    %178 = vmatpush.msra.mxu0 %v108
    %179 = vmatpush.msra.mxu0 %v107
    %180 = vmatpush.msra.mxu0 %v106
    %181 = vmatpush.msra.mxu0 %v105
    %182 = vmatpush.msra.mxu0 %v104
    %183 = vmatpush.msra.mxu0 %v103
    %184 = vmatpush.msra.mxu0 %v102
    %185 = vmatpush.msra.mxu0 %v101
    %186 = vmatpush.msra.mxu0 %v100
    %187 = vmatmul.f32.gmra.mxu0 %v58
    %v188 = vpop.f32.mrf.mxu0
    %v189 = vadd.f32 %v154, %v188
    %190 = vmatmul.f32.gmra.mxu0 %v59
    %v191 = vpop.f32.mrf.mxu0
    %v192 = vadd.f32 %v157, %v191
    %193 = vmatmul.f32.gmra.mxu0 %v60
    %v194 = vpop.f32.mrf.mxu0
    %v195 = vadd.f32 %v160, %v194
    %196 = vmatmul.f32.gmra.mxu0 %v61
    %v197 = vpop.f32.mrf.mxu0
    %v198 = vadd.f32 %v163, %v197
    %199 = vmatmul.f32.gmra.mxu0 %v62
    %v200 = vpop.f32.mrf.mxu0
    %v201 = vadd.f32 %v166, %v200
    %202 = vmatmul.f32.gmra.mxu0 %v63
    %v203 = vpop.f32.mrf.mxu0
    %v204 = vadd.f32 %v169, %v203
    %205 = vdwg.mxu0
    %v206 = vld [vmem:[%s1] sm:$0x3f]
    %vm207 = vcmask 392192
    %v209 = vsel %vm207, %v206, 0
    %211 = vmatpush.msra.mxu0 0.0
    %212 = vmatpush.msra.mxu0 0.0
    %213 = vmatpush.msra.mxu0 0.0
    %214 = vmatpush.msra.mxu0 0.0
    %215 = vmatpush.msra.mxu0 0.0
    %216 = vmatpush.msra.mxu0 0.0
    %217 = vmatpush.msra.mxu0 0.0
    %218 = vmatpush.msra.mxu0 0.0
    %219 = vmatpush.msra.mxu0 0.0
    %220 = vmatpush.msra.mxu0 0.0
    %221 = vmatpush.msra.mxu0 %v204
    %222 = vmatpush.msra.mxu0 %v201
    %223 = vmatpush.msra.mxu0 %v198
    %224 = vmatpush.msra.mxu0 %v195
    %225 = vmatpush.msra.mxu0 %v192
    %226 = vmatpush.msra.mxu0 %v189
    %227 = vmatmul.f32.gmra.mxu0 %v209
    %v228 = vpop.f32.mrf.mxu0
    %v229 = vadd.f32 0.0, %v228
    %230 = vdwg.mxu0
    %v231 = vld [vmem:[%s2 + $0x88] sm:$0xff]
    %v232 = vld [vmem:[%s2 + $0x90] sm:$0xff]
    %v233 = vld [vmem:[%s2 + $0x98] sm:$0xff]
    %v234 = vld [vmem:[%s2 + $0xa0] sm:$0xff]
    %v235 = vld [vmem:[%s2 + $0xc8] sm:$0x1]
    %v236 = vperm.slane %v235, 0
    %vm237 = vcmask 261120
    %v239 = vsel %vm237, %v229, 0
    %241 = vmatpush.msra.mxu0 0.0
    %242 = vmatpush.msra.mxu0 0.0
    %243 = vmatpush.msra.mxu0 0.0
    %244 = vmatpush.msra.mxu0 0.0
    %245 = vmatpush.msra.mxu0 0.0
    %246 = vmatpush.msra.mxu0 0.0
    %247 = vmatpush.msra.mxu0 0.0
    %248 = vmatpush.msra.mxu0 0.0
    %249 = vmatpush.msra.mxu0 0.0
    %250 = vmatpush.msra.mxu0 0.0
    %251 = vmatpush.msra.mxu0 0.0
    %252 = vmatpush.msra.mxu0 0.0
    %253 = vmatpush.msra.mxu0 %v234
    %254 = vmatpush.msra.mxu0 %v233
    %255 = vmatpush.msra.mxu0 %v232
    %256 = vmatpush.msra.mxu0 %v231
    %257 = vmatmul.f32.gmra.mxu0 %v239
    %v258 = vpop.f32.mrf.mxu0
    %v259 = vadd.f32 %v236, %v258
    %260 = vdwg.mxu0
    %v261 = vtanh.pop %v259
    %v262 = vld [vmem:[%s2 + $0xa8] sm:$0xff]
    %v263 = vld [vmem:[%s2 + $0xb0] sm:$0xff]
    %v264 = vld [vmem:[%s2 + $0xb8] sm:$0xff]
    %v265 = vld [vmem:[%s2 + $0xc0] sm:$0xff]
    %v266 = vld [vmem:[%s2 + $0xc9] sm:$0x1]
    %v267 = vperm.slane %v266, 0
    %v268 = vrot.slane %v229, 2
    %v269 = vsel %vm237, %v268, 0
    %271 = vmatpush.msra.mxu0 0.0
    %272 = vmatpush.msra.mxu0 0.0
    %273 = vmatpush.msra.mxu0 0.0
    %274 = vmatpush.msra.mxu0 0.0
    %275 = vmatpush.msra.mxu0 0.0
    %276 = vmatpush.msra.mxu0 0.0
    %277 = vmatpush.msra.mxu0 0.0
    %278 = vmatpush.msra.mxu0 0.0
    %279 = vmatpush.msra.mxu0 0.0
    %280 = vmatpush.msra.mxu0 0.0
    %281 = vmatpush.msra.mxu0 0.0
    %282 = vmatpush.msra.mxu0 0.0
    %283 = vmatpush.msra.mxu0 %v265
    %284 = vmatpush.msra.mxu0 %v264
    %285 = vmatpush.msra.mxu0 %v263
    %286 = vmatpush.msra.mxu0 %v262
    %287 = vmatmul.f32.gmra.mxu0 %v269
    %v288 = vpop.f32.mrf.mxu0
    %v289 = vadd.f32 %v267, %v288
    %290 = vdwg.mxu0
    %v291 = vtanh.pop %v289
    %vm292 = vcmask 257024
    %293 = vst.msk [vmem:[#allocation2] sm:$0xf] %vm292, %v291
    %v294 = vld [vmem:[%s3] sm:$0xff]
    %v295 = vld [vmem:[%s3 + $0x8] sm:$0xff]
    %v296 = vld [vmem:[%s3 + $0x10] sm:$0xff]
    %v297 = vld [vmem:[%s3 + $0x18] sm:$0xff]
    %v299 = vsel %vm237, %v261, 0
    %301 = vmatpush.msra.mxu0 0.0
    %302 = vmatpush.msra.mxu0 0.0
    %303 = vmatpush.msra.mxu0 0.0
    %304 = vmatpush.msra.mxu0 0.0
    %305 = vmatpush.msra.mxu0 0.0
    %306 = vmatpush.msra.mxu0 0.0
    %307 = vmatpush.msra.mxu0 0.0
    %308 = vmatpush.msra.mxu0 0.0
    %309 = vmatpush.msra.mxu0 0.0
    %310 = vmatpush.msra.mxu0 0.0
    %311 = vmatpush.msra.mxu0 0.0
    %312 = vmatpush.msra.mxu0 0.0
    %313 = vmatpush.msra.mxu0 %v297
    %314 = vmatpush.msra.mxu0 %v296
    %315 = vmatpush.msra.mxu0 %v295
    %316 = vmatpush.msra.mxu0 %v294
    %317 = vmatmul.f32.gmra.mxu0 %v299
    %v318 = vpop.f32.mrf.mxu0
    %v319 = vadd.f32 0.0, %v318
    %320 = vdwg.mxu0
    %321 = vst [vmem:[%s4] sm:$0x3] %v319
    // Predicated region
    $region18: #{biencoder_forward.1} parent=1 // pred_check
      _
    $region19: #{biencoder_forward.1} parent=1 // pred_check_branch
      %323 = sbr.rel (0) target = $region21
    $region20: #{biencoder_forward.1} parent=1 // pred_region
      _
    $region21: #{biencoder_forward.1} parent=1 // pred_fallthru
      _
    // Predicated region
    $region22: #{biencoder_forward.1} parent=1 // pred_check
      _
    $region23: #{biencoder_forward.1} parent=1 // pred_check_branch
      %325 = sbr.rel (0) target = $region25
    $region24: #{biencoder_forward.1} parent=1 // pred_region
      %327 = vsyncadd [#allocation3], 0
      %s329 = sshll.u32 [#allocation2], 4
      %s330 = int_to_ptr.vmem [resolvable:$true] %s329
      %s331 = sshll.u32 %s5, 4
      %s332 = int_to_ptr.hbm [resolvable:$true] %s331
      %334 = dma.vmem_to_hbm [thread:$0]  %s330, 64, %s332, [#allocation3]
    $region25: #{biencoder_forward.1} parent=1 // pred_fallthru
      _
    // Predicated region
    $region26: #{biencoder_forward.1} parent=1 // pred_check
      _
    $region27: #{biencoder_forward.1} parent=1 // pred_check_branch
      %336 = sbr.rel (0) target = $region29
    $region28: #{biencoder_forward.1} parent=1 // pred_region
      _
    $region29: #{biencoder_forward.1} parent=1 // pred_fallthru
      _
    // Predicated region
    $region30: #{biencoder_forward.1} parent=1 // pred_check
      _
    $region31: #{biencoder_forward.1} parent=1 // pred_check_branch
      %338 = sbr.rel (0) target = $region33
    $region32: #{biencoder_forward.1} parent=1 // pred_region
      %340 = dma.done [#allocation3], 64
    $region33: #{biencoder_forward.1} parent=1 // pred_fallthru
      _
    %341 = vsyncpa [#allocation3], 1

</llo_original>
